<compile_context>
chip_gen: v7x
topology: tpu7x:2x2x1
jax: 0.10.0
libtpu: 0.0.40
codegen_flags: <defaults>
</compile_context>

<pallas_src>
import functools
import math

import jax
import jax.numpy as jnp
from jax.experimental import pallas as pl
from jax.experimental.pallas import tpu as pltpu


def _group_norm_kernel(x_ref, gamma_ref, beta_ref, o_ref, *, eps):
    # One (row_tile, K) tile: each row is a full (batch, group) slice.
    x = x_ref[...].astype(jnp.float32)
    mean = jnp.mean(x, axis=-1, keepdims=True)
    centered = x - mean
    var = jnp.mean(centered * centered, axis=-1, keepdims=True)
    inv = jax.lax.rsqrt(var + eps)
    # Fused normalize + affine; single cast at the store.
    o_ref[...] = (centered * inv * gamma_ref[...] + beta_ref[...]).astype(o_ref.dtype)


def _pick_row_tile(rows, k, itemsize, groups):
    """Row tile: multiple of `groups` (=> multiple of 8/16 sublanes), VMEM-budgeted,
    and small enough that the grid has >= 2 steps when the problem allows it."""
    budget_bytes = 2 * 1024 * 1024  # per x tile buffer; ~8-10 MiB total with dbl-buffering
    max_rows_vmem = max(groups, (budget_bytes // max(1, k * itemsize)) // groups * groups)
    row_tile = min(512, max_rows_vmem)          # lane-/pipeline-friendly default
    if rows >= 2 * groups:                      # prefer >=2 grid steps (v7x: 2 TCs)
        row_tile = min(row_tile, max(groups, (rows // 2) // groups * groups))
    return max(groups, min(row_tile, rows))


@functools.partial(jax.jit, static_argnames=("num_groups", "eps"))
def group_norm(x, gamma, beta, num_groups=32, eps=1e-6):
    """PyTorch-equivalent GroupNorm forward. x: (N, C, *spatial); gamma/beta: (C,)."""
    n, c = x.shape[0], x.shape[1]
    g = num_groups
    assert c % g == 0, "channels must be divisible by num_groups"
    cg = c // g
    spatial = int(math.prod(x.shape[2:])) if x.ndim > 2 else 1
    k = cg * spatial
    rows = n * g

    x2d = x.reshape(rows, k)

    # Per-group affine vectors, laid out to match a flattened (Cg, spatial) row.
    gamma_gk = jnp.broadcast_to(
        gamma.astype(jnp.float32).reshape(g, cg, 1), (g, cg, spatial)).reshape(g, k)
    beta_gk = jnp.broadcast_to(
        beta.astype(jnp.float32).reshape(g, cg, 1), (g, cg, spatial)).reshape(g, k)

    itemsize = jnp.dtype(x.dtype).itemsize
    row_tile = _pick_row_tile(rows, k, itemsize, g)

    # row_tile is a multiple of g, so every tile starts on a group boundary and the
    # gamma/beta tile is identical for all grid steps (constant index_map).
    reps = row_tile // g
    gamma_t = jnp.tile(gamma_gk, (reps, 1))  # (row_tile, k), hoisted broadcast
    beta_t = jnp.tile(beta_gk, (reps, 1))

    grid = (pl.cdiv(rows, row_tile),)

    out2d = pl.pallas_call(
        functools.partial(_group_norm_kernel, eps=float(eps)),
        out_shape=jax.ShapeDtypeStruct((rows, k), x.dtype),
        grid_spec=pltpu.PrefetchScalarGridSpec(
            num_scalar_prefetch=0,
            grid=grid,
            in_specs=[
                pl.BlockSpec((row_tile, k), lambda i: (i, 0)),
                pl.BlockSpec((row_tile, k), lambda i: (0, 0)),  # constant gamma tile
                pl.BlockSpec((row_tile, k), lambda i: (0, 0)),  # constant beta tile
            ],
            out_specs=pl.BlockSpec((row_tile, k), lambda i: (i, 0)),
        ),
        compiler_params=pltpu.CompilerParams(
            dimension_semantics=("parallel",),
            vmem_limit_bytes=32 * 1024 * 1024,  # explicit scoped-VMEM (safe on v5e/v6e/v7x)
        ),
    )(x2d, gamma_t, beta_t)

    return out2d.reshape(x.shape)


def _ref_group_norm(x, gamma, beta, num_groups=32, eps=1e-6):
    n, c = x.shape[0], x.shape[1]
    xr = x.astype(jnp.float32).reshape(n, num_groups, -1)
    mean = xr.mean(axis=-1, keepdims=True)
    var = ((xr - mean) ** 2).mean(axis=-1, keepdims=True)
    xn = ((xr - mean) / jnp.sqrt(var + eps)).reshape(x.shape)
    bshape = (1, c) + (1,) * (x.ndim - 2)
    return (xn * gamma.reshape(bshape) + beta.reshape(bshape)).astype(x.dtype)


if __name__ == "__main__":
    key = jax.random.PRNGKey(0)
    k_x, k_g, k_b = jax.random.split(key, 3)

    # Small shape consistent with GroupNorm(num_groups=32): channels must be a
    # multiple of 32.  batch=2, channels=64 (2 channels/group), 8x8 spatial.
    batch, channels, h, w = 2, 64, 8, 8

    x = jax.random.normal(k_x, (batch, channels, h, w), dtype=jnp.float32)
    # Non-trivial affine params (deterministic) to exercise the gamma/beta path;
    # PyTorch default init is gamma=1, beta=0, which is a special case of this.
    gamma = 1.0 + 0.1 * jax.random.normal(k_g, (channels,), dtype=jnp.float32)
    beta = 0.1 * jax.random.normal(k_b, (channels,), dtype=jnp.float32)

    out = group_norm(x, gamma, beta, num_groups=32, eps=1e-6)
    out = jax.block_until_ready(out)

    ref = _ref_group_norm(x, gamma, beta, num_groups=32, eps=1e-6)
    assert out.shape == x.shape
    assert jnp.allclose(out, ref, atol=1e-5, rtol=1e-5), float(jnp.max(jnp.abs(out - ref)))

    print("KERNEL_OK")
</pallas_src>

<mosaic_0001>
module attributes {stable_mosaic.version = 11 : i64} {
  func.func @_group_norm_kernel(%arg0: i32, %arg1: memref<32x128xf32, #tpu.memory_space<vmem>>, %arg2: memref<32x128xf32, #tpu.memory_space<vmem>>, %arg3: memref<32x128xf32, #tpu.memory_space<vmem>>, %arg4: memref<32x128xf32, #tpu.memory_space<vmem>>) attributes {dimension_semantics = [#tpu.dimension_semantics<parallel>], iteration_bounds = array<i64: 2>, scalar_prefetch = 0 : i64, scratch_operands = 0 : i64, tpu.core_type = #tpu.core_type<tc>, window_params = [{transform_indices = @transform_0, window_bounds = array<i64: 32, 128>}, {pipeline_mode = #tpu.pipeline_mode<synchronous>, transform_indices = @transform_1, window_bounds = array<i64: 32, 128>}, {pipeline_mode = #tpu.pipeline_mode<synchronous>, transform_indices = @transform_2, window_bounds = array<i64: 32, 128>}, {transform_indices = @transform_3, window_bounds = array<i64: 32, 128>}]} {
    %c0 = arith.constant 0 : index
    %c0_0 = arith.constant 0 : index
    %0 = vector.load %arg1[%c0, %c0_0] : memref<32x128xf32, #tpu.memory_space<vmem>>, vector<32x128xf32>
    %cst = arith.constant dense<0.000000e+00> : vector<32xf32>
    %1 = vector.multi_reduction <add>, %0, %cst [1] : vector<32x128xf32> to vector<32xf32>
    %2 = vector.shape_cast %1 : vector<32xf32> to vector<32x1xf32>
    %cst_1 = arith.constant 1.280000e+02 : f32
    %3 = vector.broadcast %cst_1 : f32 to vector<32x1xf32>
    %4 = arith.divf %2, %3 : vector<32x1xf32>
    %5 = vector.broadcast %4 : vector<32x1xf32> to vector<32x128xf32>
    %6 = arith.subf %0, %5 : vector<32x128xf32>
    %7 = arith.mulf %6, %6 : vector<32x128xf32>
    %cst_2 = arith.constant dense<0.000000e+00> : vector<32xf32>
    %8 = vector.multi_reduction <add>, %7, %cst_2 [1] : vector<32x128xf32> to vector<32xf32>
    %9 = vector.shape_cast %8 : vector<32xf32> to vector<32x1xf32>
    %cst_3 = arith.constant 1.280000e+02 : f32
    %10 = vector.broadcast %cst_3 : f32 to vector<32x1xf32>
    %11 = arith.divf %9, %10 : vector<32x1xf32>
    %cst_4 = arith.constant 9.99999997E-7 : f32
    %12 = vector.broadcast %cst_4 : f32 to vector<32x1xf32>
    %13 = arith.addf %11, %12 : vector<32x1xf32>
    %14 = math.rsqrt %13 : vector<32x1xf32>
    %15 = vector.broadcast %14 : vector<32x1xf32> to vector<32x128xf32>
    %16 = arith.mulf %6, %15 : vector<32x128xf32>
    %c0_5 = arith.constant 0 : index
    %c0_6 = arith.constant 0 : index
    %17 = vector.load %arg2[%c0_5, %c0_6] : memref<32x128xf32, #tpu.memory_space<vmem>>, vector<32x128xf32>
    %18 = arith.mulf %16, %17 : vector<32x128xf32>
    %c0_7 = arith.constant 0 : index
    %c0_8 = arith.constant 0 : index
    %19 = vector.load %arg3[%c0_7, %c0_8] : memref<32x128xf32, #tpu.memory_space<vmem>>, vector<32x128xf32>
    %20 = arith.addf %18, %19 : vector<32x128xf32>
    %c0_9 = arith.constant 0 : index
    %c0_10 = arith.constant 0 : index
    %21 = vector.load %arg4[%c0_9, %c0_10] : memref<32x128xf32, #tpu.memory_space<vmem>>, vector<32x128xf32>
    tpu.vector_store %arg4[%c0_9, %c0_10], %20 {strides = array<i32>} : memref<32x128xf32, #tpu.memory_space<vmem>>, vector<32x128xf32>,
    return
  }
  func.func @transform_0(%arg0: i32) -> (i32, i32) {
    %c0_i32 = arith.constant 0 : i32
    %c0_i32_0 = arith.constant 0 : i32
    return %arg0, %c0_i32 : i32, i32
  }
  func.func @transform_1(%arg0: i32) -> (i32, i32) {
    %c0_i32 = arith.constant 0 : i32
    %c0_i32_0 = arith.constant 0 : i32
    %c0_i32_1 = arith.constant 0 : i32
    return %c0_i32, %c0_i32_0 : i32, i32
  }
  func.func @transform_2(%arg0: i32) -> (i32, i32) {
    %c0_i32 = arith.constant 0 : i32
    %c0_i32_0 = arith.constant 0 : i32
    %c0_i32_1 = arith.constant 0 : i32
    return %c0_i32, %c0_i32_0 : i32, i32
  }
  func.func @transform_3(%arg0: i32) -> (i32, i32) {
    %c0_i32 = arith.constant 0 : i32
    %c0_i32_0 = arith.constant 0 : i32
    return %arg0, %c0_i32 : i32, i32
  }
}

</mosaic_0001>

<llo_original>
// kernel: group_norm.1
$region0: #{group_norm.1}
  #allocation0 [shape = 'u32[]', space=smem, size = 0x4, offset = 0x4, fixed_abs, tag = 'smem constant byte address 0x4 - core index']
  #allocation1 [shape = 'u32[144,128]{1,0:T(1,128)}', space=vmem, size = 0x12000, scoped, tag = 'internal scratch']
  %s0 = inlined_call_operand.vmem [shape: f32[64,128], index: 0, kind: input, shape index: {}]
  %s1 = inlined_call_operand.vmem [shape: f32[32,128], index: 1, kind: input, shape index: {}]
  %s2 = inlined_call_operand.vmem [shape: f32[32,128], index: 2, kind: input, shape index: {}]
  %s3 = inlined_call_operand.vmem [shape: f32[64,128], index: 3, kind: output, shape index: {}]
  %s4 = sld [smem:[#allocation0]]
  $region45: #{group_norm.1} parent=0
    _
  %s6 = ssub.s32 1, %s4
  %s7 = scalar_select 0, %s6, %s4
  loop: start=0, step=1, limit=4
  $region2: #{group_norm.1} parent=0 // loop_pre_header
    _
  $region3: #{group_norm.1} parent=0 // loop_header
    %s9 = sphi 0, %s13
    %p10 = scmp.ge.s32.totalorder %s9, 4
    %s19 = sphi 0, %s21
    %s22 = sphi 0, %s19
    %s23 = sphi 0, %s22
    %s39 = sphi 0, %s23
    %s43 = sphi 0, %s43
    %s45 = sphi 0, %s43
    %s46 = sphi 0, %s45
    %s60 = sphi 0, %s46
    %s64 = sphi 0, %s64
    %s66 = sphi 0, %s64
    %s67 = sphi 0, %s66
    %s81 = sphi 0, %s67
    %s87 = sphi 0, %s89
    %s90 = sphi 0, %s87
    %s91 = sphi 0, %s90
    %s107 = sphi 0, %s91
  $region4: #{group_norm.1} parent=0 // loop_header_branch
    %12 = sbr.rel (%p10) target = $region8
  $region5: #{group_norm.1} parent=0 // loop_body
    %s14 = ssub.s32 %s9, 1
    %s15 = ssub.s32 %s9, 2
    %s16 = sadd.s32 %s9, 1
    %s17 = ssub.s32 %s9, %s16
    %p18 = scmp.eq.s32.totalorder %s17, 0
    %s20 = sadd.s32 %s19, 1
    %s21 = scalar_select %p18, %s19, %s20
    %p24 = pneg %p18
    %p25 = scmp.eq.s32.totalorder %s9, 1
    %p26 = por %p24, %p25
    %p27 = scmp.ne.s32.totalorder %s19, %s22
    %p28 = scmp.eq.s32.totalorder %s9, 0
    %p29 = por %p27, %p28
    %p30 = scmp.ne.s32.totalorder %s19, %s22
    %p31 = scmp.eq.s32.totalorder %s14, 1
    %p32 = por %p30, %p31
    %p33 = scmp.ne.s32.totalorder %s22, %s23
    %p34 = scmp.eq.s32.totalorder %s14, 0
    %p35 = por %p33, %p34
    %p36 = scmp.ne.s32.totalorder %s22, %s23
    %p37 = scmp.eq.s32.totalorder %s15, 1
    %p38 = por %p36, %p37
    %p40 = scmp.ne.s32.totalorder %s23, %s39
    %p41 = scmp.eq.s32.totalorder %s15, 0
    %p42 = por %p40, %p41
    %s44 = sadd.s32 %s43, 1
    %p47 = scmp.eq.s32.totalorder %s9, 1
    %p48 = scmp.ne.s32.totalorder %s43, %s45
    %p49 = scmp.eq.s32.totalorder %s9, 0
    %p50 = por %p48, %p49
    %p51 = scmp.ne.s32.totalorder %s43, %s45
    %p52 = scmp.eq.s32.totalorder %s14, 1
    %p53 = por %p51, %p52
    %p54 = scmp.ne.s32.totalorder %s45, %s46
    %p55 = scmp.eq.s32.totalorder %s14, 0
    %p56 = por %p54, %p55
    %p57 = scmp.ne.s32.totalorder %s45, %s46
    %p58 = scmp.eq.s32.totalorder %s15, 1
    %p59 = por %p57, %p58
    %p61 = scmp.ne.s32.totalorder %s46, %s60
    %p62 = scmp.eq.s32.totalorder %s15, 0
    %p63 = por %p61, %p62
    %s65 = sadd.s32 %s64, 1
    %p68 = scmp.eq.s32.totalorder %s9, 1
    %p69 = scmp.ne.s32.totalorder %s64, %s66
    %p70 = scmp.eq.s32.totalorder %s9, 0
    %p71 = por %p69, %p70
    %p72 = scmp.ne.s32.totalorder %s64, %s66
    %p73 = scmp.eq.s32.totalorder %s14, 1
    %p74 = por %p72, %p73
    %p75 = scmp.ne.s32.totalorder %s66, %s67
    %p76 = scmp.eq.s32.totalorder %s14, 0
    %p77 = por %p75, %p76
    %p78 = scmp.ne.s32.totalorder %s66, %s67
    %p79 = scmp.eq.s32.totalorder %s15, 1
    %p80 = por %p78, %p79
    %p82 = scmp.ne.s32.totalorder %s67, %s81
    %p83 = scmp.eq.s32.totalorder %s15, 0
    %p84 = por %p82, %p83
    %s85 = ssub.s32 %s9, %s16
    %p86 = scmp.eq.s32.totalorder %s85, 0
    %s88 = sadd.s32 %s87, 1
    %s89 = scalar_select %p86, %s87, %s88
    %p92 = pneg %p86
    %p93 = scmp.eq.s32.totalorder %s9, 1
    %p94 = por %p92, %p93
    %p95 = scmp.ne.s32.totalorder %s87, %s90
    %p96 = scmp.eq.s32.totalorder %s9, 0
    %p97 = por %p95, %p96
    %p98 = scmp.ne.s32.totalorder %s87, %s90
    %p99 = scmp.eq.s32.totalorder %s14, 1
    %p100 = por %p98, %p99
    %p101 = scmp.ne.s32.totalorder %s90, %s91
    %p102 = scmp.eq.s32.totalorder %s14, 0
    %p103 = por %p101, %p102
    %p104 = scmp.ne.s32.totalorder %s90, %s91
    %p105 = scmp.eq.s32.totalorder %s15, 1
    %p106 = por %p104, %p105
    %p108 = scmp.ne.s32.totalorder %s91, %s107
    %p109 = scmp.eq.s32.totalorder %s15, 0
    %p110 = por %p108, %p109
    %p111 = scmp.le.s32.totalorder 1, %s9
    %p112 = scmp.lt.s32.totalorder %s9, 3
    %p113 = pnand %p111, %p112
    %p114 = pneg %p113
    // Predicated region
    $region9: #{group_norm.1} parent=5 // pred_check
      _
    $region10: #{group_norm.1} parent=5 // pred_check_branch
      %116 = sbr.rel (%p113) target = $region12
    $region11: #{group_norm.1} parent=5 // pred_region
      %s117 = ssub.s32 %s9, 1
      // Predicated region
      $region13: #{group_norm.1} parent=11 // pred_check
        %p118 = pneg %p56
      $region14: #{group_norm.1} parent=11 // pred_check_branch
        %120 = sbr.rel (%p118) target = $region16
      $region15: #{group_norm.1} parent=11 // pred_region
        _
      $region16: #{group_norm.1} parent=11 // pred_fallthru
        _
      // Predicated region
      $region17: #{group_norm.1} parent=11 // pred_check
        %p121 = pneg %p77
      $region18: #{group_norm.1} parent=11 // pred_check_branch
        %123 = sbr.rel (%p121) target = $region20
      $region19: #{group_norm.1} parent=11 // pred_region
        _
      $region20: #{group_norm.1} parent=11 // pred_fallthru
        _
    $region12: #{group_norm.1} parent=5 // pred_fallthru
      _
    %p124 = scmp.lt.s32.totalorder %s9, 2
    // Predicated region
    $region21: #{group_norm.1} parent=5 // pred_check
      %p125 = pneg %p124
    $region22: #{group_norm.1} parent=5 // pred_check_branch
      %127 = sbr.rel (%p125) target = $region24
    $region23: #{group_norm.1} parent=5 // pred_region
      // Predicated region
      $region25: #{group_norm.1} parent=23 // pred_check
        %p128 = pneg %p29
      $region26: #{group_norm.1} parent=23 // pred_check_branch
        %130 = sbr.rel (%p128) target = $region28
      $region27: #{group_norm.1} parent=23 // pred_region
        %s131 = smul.u32 4, %s9
        %p132 = scmp.lt.s32.totalorder %s131, 7
        %s133 = scalar_select %p132, %s131, 7
        %s134 = smul.addr %s133, 8
        %s135 = scalar_lea.vmem %s0, %s134
        %s136 = smul.u32 4, %s9
      $region28: #{group_norm.1} parent=23 // pred_fallthru
        _
    $region24: #{group_norm.1} parent=5 // pred_fallthru
      _
    %p137 = scmp.le.s32.totalorder 1, %s9
    %p138 = scmp.lt.s32.totalorder %s9, 3
    %p139 = pnand %p137, %p138
    %p140 = pneg %p139
    // Predicated region
    $region29: #{group_norm.1} parent=5 // pred_check
      _
    $region30: #{group_norm.1} parent=5 // pred_check_branch
      %142 = sbr.rel (%p139) target = $region32
    $region31: #{group_norm.1} parent=5 // pred_region
      %s143 = ssub.s32 %s9, 1
      %s144 = smul.u32 4, %s14
      %p145 = scmp.lt.s32.totalorder %s144, 7
      %s146 = scalar_select %p145, %s144, 7
      %s147 = smul.addr %s146, 8
      %s148 = scalar_lea.vmem %s0, %s147
      %p149 = pneg %p35
      %p150 = pneg %p32
      %p151 = pneg %p56
      %p152 = pneg %p53
      %p153 = pneg %p77
      %p154 = pneg %p74
      %p155 = pneg %p103
      %p156 = pneg %p100
      %s157 = smul.u32 4, %s14
      %p158 = scmp.lt.s32.totalorder %s157, 7
      %s159 = scalar_select %p158, %s157, 7
      %s160 = smul.addr %s159, 8
      %s161 = scalar_lea.vmem %s3, %s160
      %s162 = smul.u32 4, %s14
      %p163 = scmp.lt.s32.totalorder %s162, 7
      %s164 = scalar_select %p163, %s162, 7
      %s165 = smul.addr %s164, 8
      %s166 = scalar_lea.vmem %s0, %s165
      %s167 = smul.u32 4, %s14
      %s168 = smul.u32 4, %s14
      %p169 = scmp.lt.s32.totalorder %s168, 7
      %s170 = scalar_select %p169, %s168, 7
      %s171 = smul.addr %s170, 8
      %s172 = scalar_lea.vmem %s3, %s171
      %s173 = smul.u32 4, %s14
      %v174 = vld [vmem:[%s166] sm:$0xff]
      %v175 = vld [vmem:[%s166 + $0x8] sm:$0xff]
      %v176 = vld [vmem:[%s166 + $0x10] sm:$0xff]
      %v177 = vld [vmem:[%s166 + $0x18] sm:$0xff]
      %178 = vadd.xlane.f32.xlu0 %v174
      %v179 = vpop.xlane.xlu0 %178
      %180 = vadd.xlane.f32.xlu0 %v175
      %v181 = vpop.xlane.xlu0 %180
      %182 = vadd.xlane.f32.xlu0 %v176
      %v183 = vpop.xlane.xlu0 %182
      %184 = vadd.xlane.f32.xlu0 %v177
      %v185 = vpop.xlane.xlu0 %184
      %v186 = vrcp.pop 128.0
      %v187 = vmul.f32 %v179, %v186
      %v188 = vmul.f32 %v181, %v186
      %v189 = vmul.f32 %v183, %v186
      %v190 = vmul.f32 %v185, %v186
      %v191 = vsub.f32 %v174, %v187
      %v192 = vsub.f32 %v175, %v188
      %v193 = vsub.f32 %v176, %v189
      %v194 = vsub.f32 %v177, %v190
      %v195 = vmul.f32 %v191, %v191
      %v196 = vmul.f32 %v192, %v192
      %v197 = vmul.f32 %v193, %v193
      %v198 = vmul.f32 %v194, %v194
      %199 = vadd.xlane.f32.xlu0 %v195
      %v200 = vpop.xlane.xlu0 %199
      %201 = vadd.xlane.f32.xlu0 %v196
      %v202 = vpop.xlane.xlu0 %201
      %203 = vadd.xlane.f32.xlu0 %v197
      %v204 = vpop.xlane.xlu0 %203
      %205 = vadd.xlane.f32.xlu0 %v198
      %v206 = vpop.xlane.xlu0 %205
      %v207 = vmul.f32 %v200, %v186
      %v208 = vmul.f32 %v202, %v186
      %v209 = vmul.f32 %v204, %v186
      %v210 = vmul.f32 %v206, %v186
      %v211 = vadd.f32 %v207, 1e-06
      %v212 = vadd.f32 %v208, 1e-06
      %v213 = vadd.f32 %v209, 1e-06
      %v214 = vadd.f32 %v210, 1e-06
      %v215 = vrsqrt.pop %v211
      %v216 = vrsqrt.pop %v212
      %v217 = vrsqrt.pop %v213
      %v218 = vrsqrt.pop %v214
      %v219 = vmul.f32 %v191, %v215
      %v220 = vmul.f32 %v192, %v216
      %v221 = vmul.f32 %v193, %v217
      %v222 = vmul.f32 %v194, %v218
      %v223 = vld [vmem:[%s1] sm:$0xff]
      %v224 = vld [vmem:[%s1 + $0x8] sm:$0xff]
      %v225 = vld [vmem:[%s1 + $0x10] sm:$0xff]
      %v226 = vld [vmem:[%s1 + $0x18] sm:$0xff]
      %v227 = vmul.f32 %v219, %v223
      %v228 = vmul.f32 %v220, %v224
      %v229 = vmul.f32 %v221, %v225
      %v230 = vmul.f32 %v222, %v226
      %v231 = vld [vmem:[%s2] sm:$0xff]
      %v232 = vld [vmem:[%s2 + $0x8] sm:$0xff]
      %v233 = vld [vmem:[%s2 + $0x10] sm:$0xff]
      %v234 = vld [vmem:[%s2 + $0x18] sm:$0xff]
      %v235 = vadd.f32 %v227, %v231
      %v236 = vadd.f32 %v228, %v232
      %v237 = vadd.f32 %v229, %v233
      %v238 = vadd.f32 %v230, %v234
      %239 = vst [vmem:[%s172] sm:$0xff] %v235
      %240 = vst [vmem:[%s172 + $0x8] sm:$0xff] %v236
      %241 = vst [vmem:[%s172 + $0x10] sm:$0xff] %v237
      %242 = vst [vmem:[%s172 + $0x18] sm:$0xff] %v238
      %s243 = smul.u32 4, %s14
      %p244 = scmp.lt.s32.totalorder %s243, 7
      %s245 = scalar_select %p244, %s243, 7
      %s246 = smul.addr %s245, 8
      %s247 = scalar_lea.vmem %s3, %s246
      // Predicated region
      $region33: #{group_norm.1} parent=31 // pred_check
        %p248 = pneg %p100
      $region34: #{group_norm.1} parent=31 // pred_check_branch
        %250 = sbr.rel (%p248) target = $region36
      $region35: #{group_norm.1} parent=31 // pred_region
        %s251 = smul.u32 4, %s14
      $region36: #{group_norm.1} parent=31 // pred_fallthru
        _
    $region32: #{group_norm.1} parent=5 // pred_fallthru
      _
    %p252 = scmp.le.s32.totalorder 2, %s9
    // Predicated region
    $region37: #{group_norm.1} parent=5 // pred_check
      %p253 = pneg %p252
    $region38: #{group_norm.1} parent=5 // pred_check_branch
      %255 = sbr.rel (%p253) target = $region40
    $region39: #{group_norm.1} parent=5 // pred_region
      %s256 = ssub.s32 %s9, 2
      // Predicated region
      $region41: #{group_norm.1} parent=39 // pred_check
        %p257 = pneg %p106
      $region42: #{group_norm.1} parent=39 // pred_check_branch
        %259 = sbr.rel (%p257) target = $region44
      $region43: #{group_norm.1} parent=39 // pred_region
        %s260 = smul.u32 4, %s15
        %p261 = scmp.lt.s32.totalorder %s260, 7
        %s262 = scalar_select %p261, %s260, 7
        %s263 = smul.addr %s262, 8
        %s264 = scalar_lea.vmem %s3, %s263
      $region44: #{group_norm.1} parent=39 // pred_fallthru
        _
    $region40: #{group_norm.1} parent=5 // pred_fallthru
      _
  $region6: #{group_norm.1} parent=0 // loop_footer
    %s13 = sadd.s32 1, %s9
  $region7: #{group_norm.1} parent=0 // loop_footer_branch
    %8 = sbr.rel target = $region3
  $region8: #{group_norm.1} parent=0 // loop_exit
    _

</llo_original>
